<compile_context>
chip_gen: v7x
topology: tpu7x:2x2x1
jax: 0.10.0
libtpu: 0.0.40
codegen_flags: <defaults>
</compile_context>

<pallas_src>
import functools

import jax
import jax.numpy as jnp
from jax.experimental import pallas as pl
from jax.experimental.pallas import tpu as pltpu


def _mlp_kernel(x_ref, w1_ref, b1_ref, w2_ref, b2_ref, w3_ref, b3_ref, o_ref):
    # Whole hot path (3 matmuls + ReLUs + sigmoid) fused, VMEM resident.
    # Matmul inputs are bf16 (MXU peak path on v6e/v7x); accumulation and
    # bias/activation math stay f32 via preferred_element_type.
    x = x_ref[...]
    h1 = jnp.dot(x, w1_ref[...], preferred_element_type=jnp.float32) + b1_ref[...]
    h1 = jnp.maximum(h1, 0.0).astype(jnp.bfloat16)
    h2 = jnp.dot(h1, w2_ref[...], preferred_element_type=jnp.float32) + b2_ref[...]
    h2 = jnp.maximum(h2, 0.0).astype(jnp.bfloat16)
    z = jnp.dot(h2, w3_ref[...], preferred_element_type=jnp.float32) + b3_ref[...]
    o_ref[...] = jax.nn.sigmoid(z).astype(o_ref.dtype)


def _round_up(x, m):
    return (x + m - 1) // m * m


@functools.partial(jax.jit, static_argnames=("block_b",))
def mlp_forward(x, w1, b1, w2, b2, w3, b3, *, block_b=128):
    B, d_in = x.shape
    d_fc1 = w1.shape[1]
    d_hidden = w2.shape[1]
    d_out = w3.shape[1]

    # Lane-dense (multiple-of-128) feature dims; padded columns/rows are zero so the
    # forward semantics are unchanged after the final slice.
    d_in_p = _round_up(d_in, 128)
    d_fc1_p = _round_up(d_fc1, 128)
    d_hid_p = _round_up(d_hidden, 128)
    d_out_p = _round_up(d_out, 128)

    # Batch tile: big enough to fill the MXU M-dimension, but a single grid step
    # when the batch is small.  Always a multiple of 8 (sublane) and divides B_p.
    bb = min(block_b, _round_up(B, 8))
    B_p = _round_up(B, bb)
    grid = (B_p // bb,)

    f32, bf16 = jnp.float32, jnp.bfloat16

    def pad2(a, rows, cols, dtype):
        a = a.astype(f32)
        a = jnp.pad(a, ((0, rows - a.shape[0]), (0, cols - a.shape[1])))
        return a.astype(dtype)

    xp = pad2(x, B_p, d_in_p, bf16)
    w1p = pad2(w1, d_in_p, d_fc1_p, bf16)
    w2p = pad2(w2, d_fc1_p, d_hid_p, bf16)
    w3p = pad2(w3, d_hid_p, d_out_p, bf16)
    b1p = pad2(b1, 1, d_fc1_p, f32)
    b2p = pad2(b2, 1, d_hid_p, f32)
    b3p = pad2(b3, 1, d_out_p, f32)

    # --- VMEM budget (bytes): x/out tiles double-buffered, weights/biases single-buffered.
    weight_bytes = (d_in_p * d_fc1_p + d_fc1_p * d_hid_p + d_hid_p * d_out_p) * 2
    bias_bytes = (d_fc1_p + d_hid_p + d_out_p) * 4
    io_bytes = 2 * bb * d_in_p * 2 + 2 * bb * d_out_p * 4
    interm_bytes = bb * (d_fc1_p + d_hid_p) * (4 + 2)  # f32 acc + bf16 recast headroom
    vmem_needed = weight_bytes + bias_bytes + io_bytes + interm_bytes
    vmem_limit = min(max(2 * vmem_needed, 32 * 1024 * 1024), 64 * 1024 * 1024)

    # --- Advisory cost hint for the XLA scheduler.
    flops = 2 * B_p * (d_in_p * d_fc1_p + d_fc1_p * d_hid_p + d_hid_p * d_out_p)
    bytes_accessed = (
        xp.size * 2 + (w1p.size + w2p.size + w3p.size) * 2
        + (b1p.size + b2p.size + b3p.size) * 4 + B_p * d_out_p * 4
    )
    cost = pl.CostEstimate(
        flops=int(flops),
        transcendentals=int(B_p * d_out_p),
        bytes_accessed=int(bytes_accessed),
    )

    single = pl.Buffered(buffer_count=1)  # grid-invariant operands: no double buffering

    out_p = pl.pallas_call(
        _mlp_kernel,
        out_shape=jax.ShapeDtypeStruct((B_p, d_out_p), jnp.float32),
        grid_spec=pltpu.PrefetchScalarGridSpec(
            num_scalar_prefetch=0,
            grid=grid,
            in_specs=[
                pl.BlockSpec((bb, d_in_p), lambda i: (i, 0)),                          # x tile
                pl.BlockSpec((d_in_p, d_fc1_p), lambda i: (0, 0), pipeline_mode=single),   # W1
                pl.BlockSpec((1, d_fc1_p), lambda i: (0, 0), pipeline_mode=single),        # b1
                pl.BlockSpec((d_fc1_p, d_hid_p), lambda i: (0, 0), pipeline_mode=single),  # W2
                pl.BlockSpec((1, d_hid_p), lambda i: (0, 0), pipeline_mode=single),        # b2
                pl.BlockSpec((d_hid_p, d_out_p), lambda i: (0, 0), pipeline_mode=single),  # W3
                pl.BlockSpec((1, d_out_p), lambda i: (0, 0), pipeline_mode=single),        # b3
            ],
            out_specs=pl.BlockSpec((bb, d_out_p), lambda i: (i, 0)),
        ),
        compiler_params=pltpu.CompilerParams(
            dimension_semantics=("parallel",),
            vmem_limit_bytes=int(vmem_limit),
        ),
        cost_estimate=cost,
    )(xp, w1p, b1p, w2p, b2p, w3p, b3p)

    return out_p[:B, :d_out]


def init_params(key, input_size, hidden_size, output_size):
    """Deterministic synthetic init mirroring nn.Linear shapes (stored transposed)."""
    ks = jax.random.split(key, 6)

    def linear(kw, kb, fan_in, fan_out):
        bound = 1.0 / jnp.sqrt(fan_in)
        w = jax.random.uniform(kw, (fan_in, fan_out), jnp.float32, -bound, bound)
        b = jax.random.uniform(kb, (1, fan_out), jnp.float32, -bound, bound)
        return w, b

    w1, b1 = linear(ks[0], ks[1], input_size, 1024)
    w2, b2 = linear(ks[2], ks[3], 1024, hidden_size)
    w3, b3 = linear(ks[4], ks[5], hidden_size, output_size)
    return w1, b1, w2, b2, w3, b3


def mlp_reference(x, w1, b1, w2, b2, w3, b3):
    h1 = jnp.maximum(x @ w1 + b1, 0.0)
    h2 = jnp.maximum(h1 @ w2 + b2, 0.0)
    return jax.nn.sigmoid(h2 @ w3 + b3)


if __name__ == "__main__":
    input_size, hidden_size, output_size = 32, 64, 16
    batch = 16

    key = jax.random.PRNGKey(0)
    kx, kp = jax.random.split(key)
    x = jax.random.normal(kx, (batch, input_size), dtype=jnp.float32)
    params = init_params(kp, input_size, hidden_size, output_size)

    out = mlp_forward(x, *params)
    out = jax.block_until_ready(out)

    ref = mlp_reference(x, *params)
    assert out.shape == (batch, output_size)
    # bf16 MXU inputs with f32 accumulation -> slightly looser tolerance than pure f32.
    err = float(jnp.max(jnp.abs(out - ref)))
    assert jnp.allclose(out, ref, atol=2e-2, rtol=2e-2), f"max abs err = {err}"

    print("KERNEL_OK")
</pallas_src>

<mosaic_0001>
module attributes {stable_mosaic.version = 11 : i64} {
  func.func @_mlp_kernel(%arg0: i32, %arg1: memref<16x128xbf16, #tpu.memory_space<vmem>>, %arg2: memref<128x1024xbf16, #tpu.memory_space<vmem>>, %arg3: memref<1x1024xf32, #tpu.memory_space<vmem>>, %arg4: memref<1024x128xbf16, #tpu.memory_space<vmem>>, %arg5: memref<1x128xf32, #tpu.memory_space<vmem>>, %arg6: memref<128x128xbf16, #tpu.memory_space<vmem>>, %arg7: memref<1x128xf32, #tpu.memory_space<vmem>>, %arg8: memref<16x128xf32, #tpu.memory_space<vmem>>) attributes {dimension_semantics = [#tpu.dimension_semantics<parallel>], iteration_bounds = array<i64: 1>, scalar_prefetch = 0 : i64, scratch_operands = 0 : i64, tpu.core_type = #tpu.core_type<tc>, window_params = [{transform_indices = @transform_0, window_bounds = array<i64: 16, 128>}, {pipeline_mode = #tpu.pipeline_mode<synchronous>, transform_indices = @transform_1, window_bounds = array<i64: 128, 1024>}, {pipeline_mode = #tpu.pipeline_mode<synchronous>, transform_indices = @transform_2, window_bounds = array<i64: 1, 1024>}, {pipeline_mode = #tpu.pipeline_mode<synchronous>, transform_indices = @transform_3, window_bounds = array<i64: 1024, 128>}, {pipeline_mode = #tpu.pipeline_mode<synchronous>, transform_indices = @transform_4, window_bounds = array<i64: 1, 128>}, {pipeline_mode = #tpu.pipeline_mode<synchronous>, transform_indices = @transform_5, window_bounds = array<i64: 128, 128>}, {pipeline_mode = #tpu.pipeline_mode<synchronous>, transform_indices = @transform_6, window_bounds = array<i64: 1, 128>}, {transform_indices = @transform_7, window_bounds = array<i64: 16, 128>}]} {
    %c0 = arith.constant 0 : index
    %c0_0 = arith.constant 0 : index
    %0 = vector.load %arg1[%c0, %c0_0] : memref<16x128xbf16, #tpu.memory_space<vmem>>, vector<16x128xbf16>
    %c0_1 = arith.constant 0 : index
    %c0_2 = arith.constant 0 : index
    %1 = vector.load %arg2[%c0_1, %c0_2] : memref<128x1024xbf16, #tpu.memory_space<vmem>>, vector<128x1024xbf16>
    %cst = arith.constant dense<0.000000e+00> : vector<16x1024xf32>
    %2 = tpu.matmul %0, %1, %cst {dimension_numbers = #tpu.dot_dimension_numbers<[1], [0], [0], [1], [0, 0, 1, 1], [], []>} : vector<16x128xbf16>, vector<128x1024xbf16>, vector<16x1024xf32> -> vector<16x1024xf32>
    %c0_3 = arith.constant 0 : index
    %c0_4 = arith.constant 0 : index
    %3 = vector.load %arg3[%c0_3, %c0_4] : memref<1x1024xf32, #tpu.memory_space<vmem>>, vector<1x1024xf32>
    %4 = vector.broadcast %3 : vector<1x1024xf32> to vector<16x1024xf32>
    %5 = arith.addf %2, %4 : vector<16x1024xf32>
    %cst_5 = arith.constant 0.000000e+00 : f32
    %6 = vector.broadcast %cst_5 : f32 to vector<16x1024xf32>
    %7 = arith.maximumf %5, %6 : vector<16x1024xf32>
    %8 = arith.truncf %7 : vector<16x1024xf32> to vector<16x1024xbf16>
    %c0_6 = arith.constant 0 : index
    %c0_7 = arith.constant 0 : index
    %9 = vector.load %arg4[%c0_6, %c0_7] : memref<1024x128xbf16, #tpu.memory_space<vmem>>, vector<1024x128xbf16>
    %cst_8 = arith.constant dense<0.000000e+00> : vector<16x128xf32>
    %10 = tpu.matmul %8, %9, %cst_8 {dimension_numbers = #tpu.dot_dimension_numbers<[1], [0], [0], [1], [0, 0, 1, 1], [], []>} : vector<16x1024xbf16>, vector<1024x128xbf16>, vector<16x128xf32> -> vector<16x128xf32>
    %c0_9 = arith.constant 0 : index
    %c0_10 = arith.constant 0 : index
    %11 = vector.load %arg5[%c0_9, %c0_10] : memref<1x128xf32, #tpu.memory_space<vmem>>, vector<1x128xf32>
    %12 = vector.broadcast %11 : vector<1x128xf32> to vector<16x128xf32>
    %13 = arith.addf %10, %12 : vector<16x128xf32>
    %cst_11 = arith.constant 0.000000e+00 : f32
    %14 = vector.broadcast %cst_11 : f32 to vector<16x128xf32>
    %15 = arith.maximumf %13, %14 : vector<16x128xf32>
    %16 = arith.truncf %15 : vector<16x128xf32> to vector<16x128xbf16>
    %c0_12 = arith.constant 0 : index
    %c0_13 = arith.constant 0 : index
    %17 = vector.load %arg6[%c0_12, %c0_13] : memref<128x128xbf16, #tpu.memory_space<vmem>>, vector<128x128xbf16>
    %cst_14 = arith.constant dense<0.000000e+00> : vector<16x128xf32>
    %18 = tpu.matmul %16, %17, %cst_14 {dimension_numbers = #tpu.dot_dimension_numbers<[1], [0], [0], [1], [0, 0, 1, 1], [], []>} : vector<16x128xbf16>, vector<128x128xbf16>, vector<16x128xf32> -> vector<16x128xf32>
    %c0_15 = arith.constant 0 : index
    %c0_16 = arith.constant 0 : index
    %19 = vector.load %arg7[%c0_15, %c0_16] : memref<1x128xf32, #tpu.memory_space<vmem>>, vector<1x128xf32>
    %20 = vector.broadcast %19 : vector<1x128xf32> to vector<16x128xf32>
    %21 = arith.addf %18, %20 : vector<16x128xf32>
    %22 = arith.negf %21 : vector<16x128xf32>
    %23 = math.exp %22 : vector<16x128xf32>
    %cst_17 = arith.constant 1.000000e+00 : f32
    %24 = vector.broadcast %cst_17 : f32 to vector<16x128xf32>
    %25 = arith.addf %24, %23 : vector<16x128xf32>
    %26 = arith.divf %24, %25 : vector<16x128xf32>
    %c0_18 = arith.constant 0 : index
    %c0_19 = arith.constant 0 : index
    %27 = vector.load %arg8[%c0_18, %c0_19] : memref<16x128xf32, #tpu.memory_space<vmem>>, vector<16x128xf32>
    tpu.vector_store %arg8[%c0_18, %c0_19], %26 {strides = array<i32>} : memref<16x128xf32, #tpu.memory_space<vmem>>, vector<16x128xf32>,
    return
  }
  func.func @transform_0(%arg0: i32) -> (i32, i32) {
    %c0_i32 = arith.constant 0 : i32
    %c0_i32_0 = arith.constant 0 : i32
    return %arg0, %c0_i32 : i32, i32
  }
  func.func @transform_1(%arg0: i32) -> (i32, i32) {
    %c0_i32 = arith.constant 0 : i32
    %c0_i32_0 = arith.constant 0 : i32
    %c0_i32_1 = arith.constant 0 : i32
    return %c0_i32, %c0_i32_0 : i32, i32
  }
  func.func @transform_2(%arg0: i32) -> (i32, i32) {
    %c0_i32 = arith.constant 0 : i32
    %c0_i32_0 = arith.constant 0 : i32
    %c0_i32_1 = arith.constant 0 : i32
    return %c0_i32, %c0_i32_0 : i32, i32
  }
  func.func @transform_3(%arg0: i32) -> (i32, i32) {
    %c0_i32 = arith.constant 0 : i32
    %c0_i32_0 = arith.constant 0 : i32
    %c0_i32_1 = arith.constant 0 : i32
    return %c0_i32, %c0_i32_0 : i32, i32
  }
  func.func @transform_4(%arg0: i32) -> (i32, i32) {
    %c0_i32 = arith.constant 0 : i32
    %c0_i32_0 = arith.constant 0 : i32
    %c0_i32_1 = arith.constant 0 : i32
    return %c0_i32, %c0_i32_0 : i32, i32
  }
  func.func @transform_5(%arg0: i32) -> (i32, i32) {
    %c0_i32 = arith.constant 0 : i32
    %c0_i32_0 = arith.constant 0 : i32
    %c0_i32_1 = arith.constant 0 : i32
    return %c0_i32, %c0_i32_0 : i32, i32
  }
  func.func @transform_6(%arg0: i32) -> (i32, i32) {
    %c0_i32 = arith.constant 0 : i32
    %c0_i32_0 = arith.constant 0 : i32
    %c0_i32_1 = arith.constant 0 : i32
    return %c0_i32, %c0_i32_0 : i32, i32
  }
  func.func @transform_7(%arg0: i32) -> (i32, i32) {
    %c0_i32 = arith.constant 0 : i32
    %c0_i32_0 = arith.constant 0 : i32
    return %arg0, %c0_i32 : i32, i32
  }
}

</mosaic_0001>

<llo_original>
// kernel: mlp_forward.1
$region0: #{mlp_forward.1}
  #allocation0 [shape = 'u32[]', space=smem, size = 0x4, offset = 0x4, fixed_abs, tag = 'smem constant byte address 0x4 - core index']
  #allocation1 [shape = 'u32[144,128]{1,0:T(1,128)}', space=vmem, size = 0x12000, scoped, tag = 'internal scratch']
  %s0 = inlined_call_operand.vmem [shape: bf16[16,128], index: 0, kind: input, shape index: {}]
  %s1 = inlined_call_operand.vmem [shape: bf16[128,1024], index: 1, kind: input, shape index: {}]
  %s2 = inlined_call_operand.vmem [shape: f32[1,1024], index: 2, kind: input, shape index: {}]
  %s3 = inlined_call_operand.vmem [shape: bf16[1024,128], index: 3, kind: input, shape index: {}]
  %s4 = inlined_call_operand.vmem [shape: f32[1,128], index: 4, kind: input, shape index: {}]
  %s5 = inlined_call_operand.vmem [shape: bf16[128,128], index: 5, kind: input, shape index: {}]
  %s6 = inlined_call_operand.vmem [shape: f32[1,128], index: 6, kind: input, shape index: {}]
  %s7 = inlined_call_operand.hbm [shape: f32[16,128], index: 7, kind: output, shape index: {}]
  %s8 = sld [smem:[#allocation0]]
  $region38: #{mlp_forward.1} parent=0
    _
  %s10 = ssub.s32 1, %s8
  %s11 = scalar_select 0, %s10, %s8
  $region1: #{mlp_forward.1} parent=0
    #allocation2 [shape = 'u8[8192]{0}', space=vmem, size = 0x2000, scoped, tag = 'output window, operand 0, single buffered']
    #allocation3 [shape = 's32[1]{0}', space=sflag, size = 0x4, scoped, tag = 'scoped memory for mlp_forward.1']
    %12 = vsyncpa [#allocation3], 0
    // Predicated region
    $region2: #{mlp_forward.1} parent=1 // pred_check
      _
    $region3: #{mlp_forward.1} parent=1 // pred_check_branch
      %14 = sbr.rel (0) target = $region5
    $region4: #{mlp_forward.1} parent=1 // pred_region
      _
    $region5: #{mlp_forward.1} parent=1 // pred_fallthru
      _
    // Predicated region
    $region6: #{mlp_forward.1} parent=1 // pred_check
      _
    $region7: #{mlp_forward.1} parent=1 // pred_check_branch
      %16 = sbr.rel (0) target = $region9
    $region8: #{mlp_forward.1} parent=1 // pred_region
      _
    $region9: #{mlp_forward.1} parent=1 // pred_fallthru
      _
    // Predicated region
    $region10: #{mlp_forward.1} parent=1 // pred_check
      _
    $region11: #{mlp_forward.1} parent=1 // pred_check_branch
      %18 = sbr.rel (0) target = $region13
    $region12: #{mlp_forward.1} parent=1 // pred_region
      _
    $region13: #{mlp_forward.1} parent=1 // pred_fallthru
      _
    // Predicated region
    $region14: #{mlp_forward.1} parent=1 // pred_check
      _
    $region15: #{mlp_forward.1} parent=1 // pred_check_branch
      %20 = sbr.rel (0) target = $region17
    $region16: #{mlp_forward.1} parent=1 // pred_region
      _
    $region17: #{mlp_forward.1} parent=1 // pred_fallthru
      _
    // Predicated region
    $region18: #{mlp_forward.1} parent=1 // pred_check
      _
    $region19: #{mlp_forward.1} parent=1 // pred_check_branch
      %22 = sbr.rel (0) target = $region21
    $region20: #{mlp_forward.1} parent=1 // pred_region
      _
    $region21: #{mlp_forward.1} parent=1 // pred_fallthru
      _
    // Predicated region
    $region22: #{mlp_forward.1} parent=1 // pred_check
      _
    $region23: #{mlp_forward.1} parent=1 // pred_check_branch
      %24 = sbr.rel (0) target = $region25
    $region24: #{mlp_forward.1} parent=1 // pred_region
      _
    $region25: #{mlp_forward.1} parent=1 // pred_fallthru
      _
    // Predicated region
    $region26: #{mlp_forward.1} parent=1 // pred_check
      _
    $region27: #{mlp_forward.1} parent=1 // pred_check_branch
      %26 = sbr.rel (0) target = $region29
    $region28: #{mlp_forward.1} parent=1 // pred_region
      _
    $region29: #{mlp_forward.1} parent=1 // pred_fallthru
      _
    %v28 = vld [vmem:[%s0] sm:$0xf]
    %v29 = vld [vmem:[%s0 + $0x4] sm:$0xf]
    %v30 = vld [vmem:[%s1] sm:$0xff]
    %v31 = vld [vmem:[%s1 + $0x8] sm:$0xff]
    %v32 = vld [vmem:[%s1 + $0x10] sm:$0xff]
    %v33 = vld [vmem:[%s1 + $0x18] sm:$0xff]
    %v34 = vld [vmem:[%s1 + $0x20] sm:$0xff]
    %v35 = vld [vmem:[%s1 + $0x28] sm:$0xff]
    %v36 = vld [vmem:[%s1 + $0x30] sm:$0xff]
    %v37 = vld [vmem:[%s1 + $0x38] sm:$0xff]
    %v38 = vld [vmem:[%s1 + $0x40] sm:$0xff]
    %v39 = vld [vmem:[%s1 + $0x48] sm:$0xff]
    %v40 = vld [vmem:[%s1 + $0x50] sm:$0xff]
    %v41 = vld [vmem:[%s1 + $0x58] sm:$0xff]
    %v42 = vld [vmem:[%s1 + $0x60] sm:$0xff]
    %v43 = vld [vmem:[%s1 + $0x68] sm:$0xff]
    %v44 = vld [vmem:[%s1 + $0x70] sm:$0xff]
    %v45 = vld [vmem:[%s1 + $0x78] sm:$0xff]
    %v46 = vld [vmem:[%s1 + $0x80] sm:$0xff]
    %v47 = vld [vmem:[%s1 + $0x88] sm:$0xff]
    %v48 = vld [vmem:[%s1 + $0x90] sm:$0xff]
    %v49 = vld [vmem:[%s1 + $0x98] sm:$0xff]
    %v50 = vld [vmem:[%s1 + $0xa0] sm:$0xff]
    %v51 = vld [vmem:[%s1 + $0xa8] sm:$0xff]
    %v52 = vld [vmem:[%s1 + $0xb0] sm:$0xff]
    %v53 = vld [vmem:[%s1 + $0xb8] sm:$0xff]
    %v54 = vld [vmem:[%s1 + $0xc0] sm:$0xff]
    %v55 = vld [vmem:[%s1 + $0xc8] sm:$0xff]
    %v56 = vld [vmem:[%s1 + $0xd0] sm:$0xff]
    %v57 = vld [vmem:[%s1 + $0xd8] sm:$0xff]
    %v58 = vld [vmem:[%s1 + $0xe0] sm:$0xff]
    %v59 = vld [vmem:[%s1 + $0xe8] sm:$0xff]
    %v60 = vld [vmem:[%s1 + $0xf0] sm:$0xff]
    %v61 = vld [vmem:[%s1 + $0xf8] sm:$0xff]
    %v62 = vld [vmem:[%s1 + $0x100] sm:$0xff]
    %v63 = vld [vmem:[%s1 + $0x108] sm:$0xff]
    %v64 = vld [vmem:[%s1 + $0x110] sm:$0xff]
    %v65 = vld [vmem:[%s1 + $0x118] sm:$0xff]
    %v66 = vld [vmem:[%s1 + $0x120] sm:$0xff]
    %v67 = vld [vmem:[%s1 + $0x128] sm:$0xff]
    %v68 = vld [vmem:[%s1 + $0x130] sm:$0xff]
    %v69 = vld [vmem:[%s1 + $0x138] sm:$0xff]
    %v70 = vld [vmem:[%s1 + $0x140] sm:$0xff]
    %v71 = vld [vmem:[%s1 + $0x148] sm:$0xff]
    %v72 = vld [vmem:[%s1 + $0x150] sm:$0xff]
    %v73 = vld [vmem:[%s1 + $0x158] sm:$0xff]
    %v74 = vld [vmem:[%s1 + $0x160] sm:$0xff]
    %v75 = vld [vmem:[%s1 + $0x168] sm:$0xff]
    %v76 = vld [vmem:[%s1 + $0x170] sm:$0xff]
    %v77 = vld [vmem:[%s1 + $0x178] sm:$0xff]
    %v78 = vld [vmem:[%s1 + $0x180] sm:$0xff]
    %v79 = vld [vmem:[%s1 + $0x188] sm:$0xff]
    %v80 = vld [vmem:[%s1 + $0x190] sm:$0xff]
    %v81 = vld [vmem:[%s1 + $0x198] sm:$0xff]
    %v82 = vld [vmem:[%s1 + $0x1a0] sm:$0xff]
    %v83 = vld [vmem:[%s1 + $0x1a8] sm:$0xff]
    %v84 = vld [vmem:[%s1 + $0x1b0] sm:$0xff]
    %v85 = vld [vmem:[%s1 + $0x1b8] sm:$0xff]
    %v86 = vld [vmem:[%s1 + $0x1c0] sm:$0xff]
    %v87 = vld [vmem:[%s1 + $0x1c8] sm:$0xff]
    %v88 = vld [vmem:[%s1 + $0x1d0] sm:$0xff]
    %v89 = vld [vmem:[%s1 + $0x1d8] sm:$0xff]
    %v90 = vld [vmem:[%s1 + $0x1e0] sm:$0xff]
    %v91 = vld [vmem:[%s1 + $0x1e8] sm:$0xff]
    %v92 = vld [vmem:[%s1 + $0x1f0] sm:$0xff]
    %v93 = vld [vmem:[%s1 + $0x1f8] sm:$0xff]
    %v94 = vld [vmem:[%s2] sm:$0xff]
    %v96 = vlaneseq
    %v97 = vshrl.u32 %v96, 7
    %v98 = vsub.s32 0, %v97
    %v99 = vrot.slane %v94, %v98
    %v100 = vlaneseq
    %v101 = vshrl.u32 %v100, 7
    %v102 = vsub.s32 1, %v101
    %v103 = vrot.slane %v94, %v102
    %v104 = vlaneseq
    %v105 = vshrl.u32 %v104, 7
    %v106 = vsub.s32 2, %v105
    %v107 = vrot.slane %v94, %v106
    %v108 = vlaneseq
    %v109 = vshrl.u32 %v108, 7
    %v110 = vsub.s32 3, %v109
    %v111 = vrot.slane %v94, %v110
    %v112 = vlaneseq
    %v113 = vshrl.u32 %v112, 7
    %v114 = vsub.s32 4, %v113
    %v115 = vrot.slane %v94, %v114
    %v116 = vlaneseq
    %v117 = vshrl.u32 %v116, 7
    %v118 = vsub.s32 5, %v117
    %v119 = vrot.slane %v94, %v118
    %v120 = vlaneseq
    %v121 = vshrl.u32 %v120, 7
    %v122 = vsub.s32 6, %v121
    %v123 = vrot.slane %v94, %v122
    %v124 = vlaneseq
    %v125 = vshrl.u32 %v124, 7
    %v126 = vsub.s32 7, %v125
    %v127 = vrot.slane %v94, %v126
    %v138 = vunpack.c.l.b16 %v28
    %v139 = vunpack.c.l.b16 %v29
    %v140 = vpack.c.b16 %v139, %v138
    %v206 = vunpack.c.l.b16 %v30
    %v207 = vunpack.c.h.b16 %v30
    %v208 = vunpack.c.l.b16 %v31
    %v209 = vunpack.c.h.b16 %v31
    %v210 = vunpack.c.l.b16 %v32
    %v211 = vunpack.c.h.b16 %v32
    %v212 = vunpack.c.l.b16 %v33
    %v213 = vunpack.c.h.b16 %v33
    %v214 = vunpack.c.l.b16 %v34
    %v215 = vunpack.c.h.b16 %v34
    %v216 = vunpack.c.l.b16 %v35
    %v217 = vunpack.c.h.b16 %v35
    %v218 = vunpack.c.l.b16 %v36
    %v219 = vunpack.c.h.b16 %v36
    %v220 = vunpack.c.l.b16 %v37
    %v221 = vunpack.c.h.b16 %v37
    %v222 = vunpack.c.l.b16 %v38
    %v223 = vunpack.c.h.b16 %v38
    %v224 = vunpack.c.l.b16 %v39
    %v225 = vunpack.c.h.b16 %v39
    %v226 = vunpack.c.l.b16 %v40
    %v227 = vunpack.c.h.b16 %v40
    %v228 = vunpack.c.l.b16 %v41
    %v229 = vunpack.c.h.b16 %v41
    %v230 = vunpack.c.l.b16 %v42
    %v231 = vunpack.c.h.b16 %v42
    %v232 = vunpack.c.l.b16 %v43
    %v233 = vunpack.c.h.b16 %v43
    %v234 = vunpack.c.l.b16 %v44
    %v235 = vunpack.c.h.b16 %v44
    %v236 = vunpack.c.l.b16 %v45
    %v237 = vunpack.c.h.b16 %v45
    %v238 = vunpack.c.l.b16 %v46
    %v239 = vunpack.c.h.b16 %v46
    %v240 = vunpack.c.l.b16 %v47
    %v241 = vunpack.c.h.b16 %v47
    %v242 = vunpack.c.l.b16 %v48
    %v243 = vunpack.c.h.b16 %v48
    %v244 = vunpack.c.l.b16 %v49
    %v245 = vunpack.c.h.b16 %v49
    %v246 = vunpack.c.l.b16 %v50
    %v247 = vunpack.c.h.b16 %v50
    %v248 = vunpack.c.l.b16 %v51
    %v249 = vunpack.c.h.b16 %v51
    %v250 = vunpack.c.l.b16 %v52
    %v251 = vunpack.c.h.b16 %v52
    %v252 = vunpack.c.l.b16 %v53
    %v253 = vunpack.c.h.b16 %v53
    %v254 = vunpack.c.l.b16 %v54
    %v255 = vunpack.c.h.b16 %v54
    %v256 = vunpack.c.l.b16 %v55
    %v257 = vunpack.c.h.b16 %v55
    %v258 = vunpack.c.l.b16 %v56
    %v259 = vunpack.c.h.b16 %v56
    %v260 = vunpack.c.l.b16 %v57
    %v261 = vunpack.c.h.b16 %v57
    %v262 = vunpack.c.l.b16 %v58
    %v263 = vunpack.c.h.b16 %v58
    %v264 = vunpack.c.l.b16 %v59
    %v265 = vunpack.c.h.b16 %v59
    %v266 = vunpack.c.l.b16 %v60
    %v267 = vunpack.c.h.b16 %v60
    %v268 = vunpack.c.l.b16 %v61
    %v269 = vunpack.c.h.b16 %v61
    %v270 = vunpack.c.l.b16 %v62
    %v271 = vunpack.c.h.b16 %v62
    %v272 = vunpack.c.l.b16 %v63
    %v273 = vunpack.c.h.b16 %v63
    %v274 = vunpack.c.l.b16 %v64
    %v275 = vunpack.c.h.b16 %v64
    %v276 = vunpack.c.l.b16 %v65
    %v277 = vunpack.c.h.b16 %v65
    %v278 = vunpack.c.l.b16 %v66
    %v279 = vunpack.c.h.b16 %v66
    %v280 = vunpack.c.l.b16 %v67
    %v281 = vunpack.c.h.b16 %v67
    %v282 = vunpack.c.l.b16 %v68
    %v283 = vunpack.c.h.b16 %v68
    %v284 = vunpack.c.l.b16 %v69
    %v285 = vunpack.c.h.b16 %v69
    %v286 = vunpack.c.l.b16 %v70
    %v287 = vunpack.c.h.b16 %v70
    %v288 = vunpack.c.l.b16 %v71
    %v289 = vunpack.c.h.b16 %v71
    %v290 = vunpack.c.l.b16 %v72
    %v291 = vunpack.c.h.b16 %v72
    %v292 = vunpack.c.l.b16 %v73
    %v293 = vunpack.c.h.b16 %v73
    %v294 = vunpack.c.l.b16 %v74
    %v295 = vunpack.c.h.b16 %v74
    %v296 = vunpack.c.l.b16 %v75
    %v297 = vunpack.c.h.b16 %v75
    %v298 = vunpack.c.l.b16 %v76
    %v299 = vunpack.c.h.b16 %v76
    %v300 = vunpack.c.l.b16 %v77
    %v301 = vunpack.c.h.b16 %v77
    %v302 = vunpack.c.l.b16 %v78
    %v303 = vunpack.c.h.b16 %v78
    %v304 = vunpack.c.l.b16 %v79
    %v305 = vunpack.c.h.b16 %v79
    %v306 = vunpack.c.l.b16 %v80
    %v307 = vunpack.c.h.b16 %v80
    %v308 = vunpack.c.l.b16 %v81
    %v309 = vunpack.c.h.b16 %v81
    %v310 = vunpack.c.l.b16 %v82
    %v311 = vunpack.c.h.b16 %v82
    %v312 = vunpack.c.l.b16 %v83
    %v313 = vunpack.c.h.b16 %v83
    %v314 = vunpack.c.l.b16 %v84
    %v315 = vunpack.c.h.b16 %v84
    %v316 = vunpack.c.l.b16 %v85
    %v317 = vunpack.c.h.b16 %v85
    %v318 = vunpack.c.l.b16 %v86
    %v319 = vunpack.c.h.b16 %v86
    %v320 = vunpack.c.l.b16 %v87
    %v321 = vunpack.c.h.b16 %v87
    %v322 = vunpack.c.l.b16 %v88
    %v323 = vunpack.c.h.b16 %v88
    %v324 = vunpack.c.l.b16 %v89
    %v325 = vunpack.c.h.b16 %v89
    %v326 = vunpack.c.l.b16 %v90
    %v327 = vunpack.c.h.b16 %v90
    %v328 = vunpack.c.l.b16 %v91
    %v329 = vunpack.c.h.b16 %v91
    %v330 = vunpack.c.l.b16 %v92
    %v331 = vunpack.c.h.b16 %v92
    %v332 = vunpack.c.l.b16 %v93
    %v333 = vunpack.c.h.b16 %v93
    %v334 = vpack.c.b16 %v214, %v206
    %v335 = vpack.c.b16 %v215, %v207
    %v336 = vpack.c.b16 %v216, %v208
    %v337 = vpack.c.b16 %v217, %v209
    %v338 = vpack.c.b16 %v218, %v210
    %v339 = vpack.c.b16 %v219, %v211
    %v340 = vpack.c.b16 %v220, %v212
    %v341 = vpack.c.b16 %v221, %v213
    %v342 = vpack.c.b16 %v230, %v222
    %v343 = vpack.c.b16 %v231, %v223
    %v344 = vpack.c.b16 %v232, %v224
    %v345 = vpack.c.b16 %v233, %v225
    %v346 = vpack.c.b16 %v234, %v226
    %v347 = vpack.c.b16 %v235, %v227
    %v348 = vpack.c.b16 %v236, %v228
    %v349 = vpack.c.b16 %v237, %v229
    %v350 = vpack.c.b16 %v246, %v238
    %v351 = vpack.c.b16 %v247, %v239
    %v352 = vpack.c.b16 %v248, %v240
    %v353 = vpack.c.b16 %v249, %v241
    %v354 = vpack.c.b16 %v250, %v242
    %v355 = vpack.c.b16 %v251, %v243
    %v356 = vpack.c.b16 %v252, %v244
    %v357 = vpack.c.b16 %v253, %v245
    %v358 = vpack.c.b16 %v262, %v254
    %v359 = vpack.c.b16 %v263, %v255
    %v360 = vpack.c.b16 %v264, %v256
    %v361 = vpack.c.b16 %v265, %v257
    %v362 = vpack.c.b16 %v266, %v258
    %v363 = vpack.c.b16 %v267, %v259
    %v364 = vpack.c.b16 %v268, %v260
    %v365 = vpack.c.b16 %v269, %v261
    %v366 = vpack.c.b16 %v278, %v270
    %v367 = vpack.c.b16 %v279, %v271
    %v368 = vpack.c.b16 %v280, %v272
    %v369 = vpack.c.b16 %v281, %v273
    %v370 = vpack.c.b16 %v282, %v274
    %v371 = vpack.c.b16 %v283, %v275
    %v372 = vpack.c.b16 %v284, %v276
    %v373 = vpack.c.b16 %v285, %v277
    %v374 = vpack.c.b16 %v294, %v286
    %v375 = vpack.c.b16 %v295, %v287
    %v376 = vpack.c.b16 %v296, %v288
    %v377 = vpack.c.b16 %v297, %v289
    %v378 = vpack.c.b16 %v298, %v290
    %v379 = vpack.c.b16 %v299, %v291
    %v380 = vpack.c.b16 %v300, %v292
    %v381 = vpack.c.b16 %v301, %v293
    %v382 = vpack.c.b16 %v310, %v302
    %v383 = vpack.c.b16 %v311, %v303
    %v384 = vpack.c.b16 %v312, %v304
    %v385 = vpack.c.b16 %v313, %v305
    %v386 = vpack.c.b16 %v314, %v306
    %v387 = vpack.c.b16 %v315, %v307
    %v388 = vpack.c.b16 %v316, %v308
    %v389 = vpack.c.b16 %v317, %v309
    %v390 = vpack.c.b16 %v326, %v318
    %v391 = vpack.c.b16 %v327, %v319
    %v392 = vpack.c.b16 %v328, %v320
    %v393 = vpack.c.b16 %v329, %v321
    %v394 = vpack.c.b16 %v330, %v322
    %v395 = vpack.c.b16 %v331, %v323
    %v396 = vpack.c.b16 %v332, %v324
    %v397 = vpack.c.b16 %v333, %v325
    %462 = vmatprep.subr.bf16.mxu0 %v335
    %463 = vmatpush1.bf16.msra.mxu0 %v334
    %464 = vmatprep.subr.bf16.mxu0 %v343
    %465 = vmatpush1.bf16.msra.mxu0 %v342
    %466 = vmatprep.subr.bf16.mxu0 %v351
    %467 = vmatpush1.bf16.msra.mxu0 %v350
    %468 = vmatprep.subr.bf16.mxu0 %v359
    %469 = vmatpush1.bf16.msra.mxu0 %v358
    %470 = vmatprep.subr.bf16.mxu0 %v367
    %471 = vmatpush1.bf16.msra.mxu0 %v366
    %472 = vmatprep.subr.bf16.mxu0 %v375
    %473 = vmatpush1.bf16.msra.mxu0 %v374
    %474 = vmatprep.subr.bf16.mxu0 %v383
    %475 = vmatpush1.bf16.msra.mxu0 %v382
    %476 = vmatprep.subr.bf16.mxu0 %v391
    %477 = vmatpush1.bf16.msra.mxu0 %v390
    %478 = vmatprep.subr.bf16.mxu0 0
    %479 = vmatpush1.bf16.msra.mxu0 0
    %480 = vmatprep.subr.bf16.mxu0 0
    %481 = vmatpush1.bf16.msra.mxu0 0
    %482 = vmatprep.subr.bf16.mxu0 0
    %483 = vmatpush1.bf16.msra.mxu0 0
    %484 = vmatprep.subr.bf16.mxu0 0
    %485 = vmatpush1.bf16.msra.mxu0 0
    %486 = vmatprep.subr.bf16.mxu0 0
    %487 = vmatpush1.bf16.msra.mxu0 0
    %488 = vmatprep.subr.bf16.mxu0 0
    %489 = vmatpush1.bf16.msra.mxu0 0
    %490 = vmatprep.subr.bf16.mxu0 0
    %491 = vmatpush1.bf16.msra.mxu0 0
    %492 = vmatprep.subr.bf16.mxu0 0
    %493 = vmatpush1.bf16.msra.mxu0 0
    %494 = vmatprep.mubr.bf16.mxu0 0
    %495 = vmatmul.mubr.bf16.gmra.mrb[0].mxu0 %v140
    %v496 = vpop.f32.mrb[0].mxu0
    %v497 = vadd.f32 %v99, %v496
    %v498 = vpop.f32.mrb[0].mxu0
    %v499 = vadd.f32 %v103, %v498
    %v500 = vpop.f32.mrb[0].mxu0
    %v501 = vadd.f32 %v99, %v500
    %v502 = vpop.f32.mrb[0].mxu0
    %v503 = vadd.f32 %v103, %v502
    %504 = vdwg.mxu0
    %505 = vmatprep.subr.bf16.mxu0 %v337
    %506 = vmatpush1.bf16.msra.mxu0 %v336
    %507 = vmatprep.subr.bf16.mxu0 %v345
    %508 = vmatpush1.bf16.msra.mxu0 %v344
    %509 = vmatprep.subr.bf16.mxu0 %v353
    %510 = vmatpush1.bf16.msra.mxu0 %v352
    %511 = vmatprep.subr.bf16.mxu0 %v361
    %512 = vmatpush1.bf16.msra.mxu0 %v360
    %513 = vmatprep.subr.bf16.mxu0 %v369
    %514 = vmatpush1.bf16.msra.mxu0 %v368
    %515 = vmatprep.subr.bf16.mxu0 %v377
    %516 = vmatpush1.bf16.msra.mxu0 %v376
    %517 = vmatprep.subr.bf16.mxu0 %v385
    %518 = vmatpush1.bf16.msra.mxu0 %v384
    %519 = vmatprep.subr.bf16.mxu0 %v393
    %520 = vmatpush1.bf16.msra.mxu0 %v392
    %521 = vmatprep.subr.bf16.mxu0 0
    %522 = vmatpush1.bf16.msra.mxu0 0
    %523 = vmatprep.subr.bf16.mxu0 0
    %524 = vmatpush1.bf16.msra.mxu0 0
    %525 = vmatprep.subr.bf16.mxu0 0
    %526 = vmatpush1.bf16.msra.mxu0 0
    %527 = vmatprep.subr.bf16.mxu0 0
    %528 = vmatpush1.bf16.msra.mxu0 0
    %529 = vmatprep.subr.bf16.mxu0 0
    %530 = vmatpush1.bf16.msra.mxu0 0
    %531 = vmatprep.subr.bf16.mxu0 0
    %532 = vmatpush1.bf16.msra.mxu0 0
    %533 = vmatprep.subr.bf16.mxu0 0
    %534 = vmatpush1.bf16.msra.mxu0 0
    %535 = vmatprep.subr.bf16.mxu0 0
    %536 = vmatpush1.bf16.msra.mxu0 0
    %537 = vmatprep.mubr.bf16.mxu0 0
    %538 = vmatmul.mubr.bf16.gmra.mrb[0].mxu0 %v140
    %v539 = vpop.f32.mrb[0].mxu0
    %v540 = vadd.f32 %v107, %v539
    %v541 = vpop.f32.mrb[0].mxu0
    %v542 = vadd.f32 %v111, %v541
    %v543 = vpop.f32.mrb[0].mxu0
    %v544 = vadd.f32 %v107, %v543
    %v545 = vpop.f32.mrb[0].mxu0
    %v546 = vadd.f32 %v111, %v545
    %547 = vdwg.mxu0
    %548 = vmatprep.subr.bf16.mxu0 %v339
    %549 = vmatpush1.bf16.msra.mxu0 %v338
    %550 = vmatprep.subr.bf16.mxu0 %v347
    %551 = vmatpush1.bf16.msra.mxu0 %v346
    %552 = vmatprep.subr.bf16.mxu0 %v355
    %553 = vmatpush1.bf16.msra.mxu0 %v354
    %554 = vmatprep.subr.bf16.mxu0 %v363
    %555 = vmatpush1.bf16.msra.mxu0 %v362
    %556 = vmatprep.subr.bf16.mxu0 %v371
    %557 = vmatpush1.bf16.msra.mxu0 %v370
    %558 = vmatprep.subr.bf16.mxu0 %v379
    %559 = vmatpush1.bf16.msra.mxu0 %v378
    %560 = vmatprep.subr.bf16.mxu0 %v387
    %561 = vmatpush1.bf16.msra.mxu0 %v386
    %562 = vmatprep.subr.bf16.mxu0 %v395
    %563 = vmatpush1.bf16.msra.mxu0 %v394
    %564 = vmatprep.subr.bf16.mxu0 0
    %565 = vmatpush1.bf16.msra.mxu0 0
    %566 = vmatprep.subr.bf16.mxu0 0
    %567 = vmatpush1.bf16.msra.mxu0 0
    %568 = vmatprep.subr.bf16.mxu0 0
    %569 = vmatpush1.bf16.msra.mxu0 0
    %570 = vmatprep.subr.bf16.mxu0 0
    %571 = vmatpush1.bf16.msra.mxu0 0
    %572 = vmatprep.subr.bf16.mxu0 0
    %573 = vmatpush1.bf16.msra.mxu0 0
    %574 = vmatprep.subr.bf16.mxu0 0
    %575 = vmatpush1.bf16.msra.mxu0 0
    %576 = vmatprep.subr.bf16.mxu0 0
    %577 = vmatpush1.bf16.msra.mxu0 0
    %578 = vmatprep.subr.bf16.mxu0 0
    %579 = vmatpush1.bf16.msra.mxu0 0
    %580 = vmatprep.mubr.bf16.mxu0 0
    %581 = vmatmul.mubr.bf16.gmra.mrb[0].mxu0 %v140
    %v582 = vpop.f32.mrb[0].mxu0
    %v583 = vadd.f32 %v115, %v582
    %v584 = vpop.f32.mrb[0].mxu0
    %v585 = vadd.f32 %v119, %v584
    %v586 = vpop.f32.mrb[0].mxu0
    %v587 = vadd.f32 %v115, %v586
    %v588 = vpop.f32.mrb[0].mxu0
    %v589 = vadd.f32 %v119, %v588
    %590 = vdwg.mxu0
    %591 = vmatprep.subr.bf16.mxu0 %v341
    %592 = vmatpush1.bf16.msra.mxu0 %v340
    %593 = vmatprep.subr.bf16.mxu0 %v349
    %594 = vmatpush1.bf16.msra.mxu0 %v348
    %595 = vmatprep.subr.bf16.mxu0 %v357
    %596 = vmatpush1.bf16.msra.mxu0 %v356
    %597 = vmatprep.subr.bf16.mxu0 %v365
    %598 = vmatpush1.bf16.msra.mxu0 %v364
    %599 = vmatprep.subr.bf16.mxu0 %v373
    %600 = vmatpush1.bf16.msra.mxu0 %v372
    %601 = vmatprep.subr.bf16.mxu0 %v381
    %602 = vmatpush1.bf16.msra.mxu0 %v380
    %603 = vmatprep.subr.bf16.mxu0 %v389
    %604 = vmatpush1.bf16.msra.mxu0 %v388
    %605 = vmatprep.subr.bf16.mxu0 %v397
    %606 = vmatpush1.bf16.msra.mxu0 %v396
    %607 = vmatprep.subr.bf16.mxu0 0
    %608 = vmatpush1.bf16.msra.mxu0 0
    %609 = vmatprep.subr.bf16.mxu0 0
    %610 = vmatpush1.bf16.msra.mxu0 0
    %611 = vmatprep.subr.bf16.mxu0 0
    %612 = vmatpush1.bf16.msra.mxu0 0
    %613 = vmatprep.subr.bf16.mxu0 0
    %614 = vmatpush1.bf16.msra.mxu0 0
    %615 = vmatprep.subr.bf16.mxu0 0
    %616 = vmatpush1.bf16.msra.mxu0 0
    %617 = vmatprep.subr.bf16.mxu0 0
    %618 = vmatpush1.bf16.msra.mxu0 0
    %619 = vmatprep.subr.bf16.mxu0 0
    %620 = vmatpush1.bf16.msra.mxu0 0
    %621 = vmatprep.subr.bf16.mxu0 0
    %622 = vmatpush1.bf16.msra.mxu0 0
    %623 = vmatprep.mubr.bf16.mxu0 0
    %624 = vmatmul.mubr.bf16.gmra.mrb[0].mxu0 %v140
    %v625 = vpop.f32.mrb[0].mxu0
    %v626 = vadd.f32 %v123, %v625
    %v627 = vpop.f32.mrb[0].mxu0
    %v628 = vadd.f32 %v127, %v627
    %v629 = vpop.f32.mrb[0].mxu0
    %v630 = vadd.f32 %v123, %v629
    %v631 = vpop.f32.mrb[0].mxu0
    %v632 = vadd.f32 %v127, %v631
    %633 = vdwg.mxu0
    %v634 = vmax.f32 %v497, 0.0
    %v635 = vmax.f32 %v499, 0.0
    %v636 = vmax.f32 %v540, 0.0
    %v637 = vmax.f32 %v542, 0.0
    %v638 = vmax.f32 %v583, 0.0
    %v639 = vmax.f32 %v585, 0.0
    %v640 = vmax.f32 %v626, 0.0
    %v641 = vmax.f32 %v628, 0.0
    %v642 = vmax.f32 %v501, 0.0
    %v643 = vmax.f32 %v503, 0.0
    %v644 = vmax.f32 %v544, 0.0
    %v645 = vmax.f32 %v546, 0.0
    %v646 = vmax.f32 %v587, 0.0
    %v647 = vmax.f32 %v589, 0.0
    %v648 = vmax.f32 %v630, 0.0
    %v649 = vmax.f32 %v632, 0.0
    %v650 = vpack.c.bf16 %v642, %v634
    %v651 = vpack.c.bf16 %v643, %v635
    %v652 = vpack.c.bf16 %v644, %v636
    %v653 = vpack.c.bf16 %v645, %v637
    %v654 = vpack.c.bf16 %v646, %v638
    %v655 = vpack.c.bf16 %v647, %v639
    %v656 = vpack.c.bf16 %v648, %v640
    %v657 = vpack.c.bf16 %v649, %v641
    %v658 = vld [vmem:[%s3] sm:$0xf]
    %v659 = vld [vmem:[%s3 + $0x4] sm:$0xf]
    %v660 = vld [vmem:[%s3 + $0x8] sm:$0xf]
    %v661 = vld [vmem:[%s3 + $0xc] sm:$0xf]
    %v662 = vld [vmem:[%s3 + $0x10] sm:$0xf]
    %v663 = vld [vmem:[%s3 + $0x14] sm:$0xf]
    %v664 = vld [vmem:[%s3 + $0x18] sm:$0xf]
    %v665 = vld [vmem:[%s3 + $0x1c] sm:$0xf]
    %v666 = vld [vmem:[%s3 + $0x20] sm:$0xf]
    %v667 = vld [vmem:[%s3 + $0x24] sm:$0xf]
    %v668 = vld [vmem:[%s3 + $0x28] sm:$0xf]
    %v669 = vld [vmem:[%s3 + $0x2c] sm:$0xf]
    %v670 = vld [vmem:[%s3 + $0x30] sm:$0xf]
    %v671 = vld [vmem:[%s3 + $0x34] sm:$0xf]
    %v672 = vld [vmem:[%s3 + $0x38] sm:$0xf]
    %v673 = vld [vmem:[%s3 + $0x3c] sm:$0xf]
    %v674 = vld [vmem:[%s3 + $0x40] sm:$0xf]
    %v675 = vld [vmem:[%s3 + $0x44] sm:$0xf]
    %v676 = vld [vmem:[%s3 + $0x48] sm:$0xf]
    %v677 = vld [vmem:[%s3 + $0x4c] sm:$0xf]
    %v678 = vld [vmem:[%s3 + $0x50] sm:$0xf]
    %v679 = vld [vmem:[%s3 + $0x54] sm:$0xf]
    %v680 = vld [vmem:[%s3 + $0x58] sm:$0xf]
    %v681 = vld [vmem:[%s3 + $0x5c] sm:$0xf]
    %v682 = vld [vmem:[%s3 + $0x60] sm:$0xf]
    %v683 = vld [vmem:[%s3 + $0x64] sm:$0xf]
    %v684 = vld [vmem:[%s3 + $0x68] sm:$0xf]
    %v685 = vld [vmem:[%s3 + $0x6c] sm:$0xf]
    %v686 = vld [vmem:[%s3 + $0x70] sm:$0xf]
    %v687 = vld [vmem:[%s3 + $0x74] sm:$0xf]
    %v688 = vld [vmem:[%s3 + $0x78] sm:$0xf]
    %v689 = vld [vmem:[%s3 + $0x7c] sm:$0xf]
    %v690 = vld [vmem:[%s3 + $0x80] sm:$0xf]
    %v691 = vld [vmem:[%s3 + $0x84] sm:$0xf]
    %v692 = vld [vmem:[%s3 + $0x88] sm:$0xf]
    %v693 = vld [vmem:[%s3 + $0x8c] sm:$0xf]
    %v694 = vld [vmem:[%s3 + $0x90] sm:$0xf]
    %v695 = vld [vmem:[%s3 + $0x94] sm:$0xf]
    %v696 = vld [vmem:[%s3 + $0x98] sm:$0xf]
    %v697 = vld [vmem:[%s3 + $0x9c] sm:$0xf]
    %v698 = vld [vmem:[%s3 + $0xa0] sm:$0xf]
    %v699 = vld [vmem:[%s3 + $0xa4] sm:$0xf]
    %v700 = vld [vmem:[%s3 + $0xa8] sm:$0xf]
    %v701 = vld [vmem:[%s3 + $0xac] sm:$0xf]
    %v702 = vld [vmem:[%s3 + $0xb0] sm:$0xf]
    %v703 = vld [vmem:[%s3 + $0xb4] sm:$0xf]
    %v704 = vld [vmem:[%s3 + $0xb8] sm:$0xf]
    %v705 = vld [vmem:[%s3 + $0xbc] sm:$0xf]
    %v706 = vld [vmem:[%s3 + $0xc0] sm:$0xf]
    %v707 = vld [vmem:[%s3 + $0xc4] sm:$0xf]
    %v708 = vld [vmem:[%s3 + $0xc8] sm:$0xf]
    %v709 = vld [vmem:[%s3 + $0xcc] sm:$0xf]
    %v710 = vld [vmem:[%s3 + $0xd0] sm:$0xf]
    %v711 = vld [vmem:[%s3 + $0xd4] sm:$0xf]
    %v712 = vld [vmem:[%s3 + $0xd8] sm:$0xf]
    %v713 = vld [vmem:[%s3 + $0xdc] sm:$0xf]
    %v714 = vld [vmem:[%s3 + $0xe0] sm:$0xf]
    %v715 = vld [vmem:[%s3 + $0xe4] sm:$0xf]
    %v716 = vld [vmem:[%s3 + $0xe8] sm:$0xf]
    %v717 = vld [vmem:[%s3 + $0xec] sm:$0xf]
    %v718 = vld [vmem:[%s3 + $0xf0] sm:$0xf]
    %v719 = vld [vmem:[%s3 + $0xf4] sm:$0xf]
    %v720 = vld [vmem:[%s3 + $0xf8] sm:$0xf]
    %v721 = vld [vmem:[%s3 + $0xfc] sm:$0xf]
    %v722 = vld [vmem:[%s3 + $0x100] sm:$0xf]
    %v723 = vld [vmem:[%s3 + $0x104] sm:$0xf]
    %v724 = vld [vmem:[%s3 + $0x108] sm:$0xf]
    %v725 = vld [vmem:[%s3 + $0x10c] sm:$0xf]
    %v726 = vld [vmem:[%s3 + $0x110] sm:$0xf]
    %v727 = vld [vmem:[%s3 + $0x114] sm:$0xf]
    %v728 = vld [vmem:[%s3 + $0x118] sm:$0xf]
    %v729 = vld [vmem:[%s3 + $0x11c] sm:$0xf]
    %v730 = vld [vmem:[%s3 + $0x120] sm:$0xf]
    %v731 = vld [vmem:[%s3 + $0x124] sm:$0xf]
    %v732 = vld [vmem:[%s3 + $0x128] sm:$0xf]
    %v733 = vld [vmem:[%s3 + $0x12c] sm:$0xf]
    %v734 = vld [vmem:[%s3 + $0x130] sm:$0xf]
    %v735 = vld [vmem:[%s3 + $0x134] sm:$0xf]
    %v736 = vld [vmem:[%s3 + $0x138] sm:$0xf]
    %v737 = vld [vmem:[%s3 + $0x13c] sm:$0xf]
    %v738 = vld [vmem:[%s3 + $0x140] sm:$0xf]
    %v739 = vld [vmem:[%s3 + $0x144] sm:$0xf]
    %v740 = vld [vmem:[%s3 + $0x148] sm:$0xf]
    %v741 = vld [vmem:[%s3 + $0x14c] sm:$0xf]
    %v742 = vld [vmem:[%s3 + $0x150] sm:$0xf]
    %v743 = vld [vmem:[%s3 + $0x154] sm:$0xf]
    %v744 = vld [vmem:[%s3 + $0x158] sm:$0xf]
    %v745 = vld [vmem:[%s3 + $0x15c] sm:$0xf]
    %v746 = vld [vmem:[%s3 + $0x160] sm:$0xf]
    %v747 = vld [vmem:[%s3 + $0x164] sm:$0xf]
    %v748 = vld [vmem:[%s3 + $0x168] sm:$0xf]
    %v749 = vld [vmem:[%s3 + $0x16c] sm:$0xf]
    %v750 = vld [vmem:[%s3 + $0x170] sm:$0xf]
    %v751 = vld [vmem:[%s3 + $0x174] sm:$0xf]
    %v752 = vld [vmem:[%s3 + $0x178] sm:$0xf]
    %v753 = vld [vmem:[%s3 + $0x17c] sm:$0xf]
    %v754 = vld [vmem:[%s3 + $0x180] sm:$0xf]
    %v755 = vld [vmem:[%s3 + $0x184] sm:$0xf]
    %v756 = vld [vmem:[%s3 + $0x188] sm:$0xf]
    %v757 = vld [vmem:[%s3 + $0x18c] sm:$0xf]
    %v758 = vld [vmem:[%s3 + $0x190] sm:$0xf]
    %v759 = vld [vmem:[%s3 + $0x194] sm:$0xf]
    %v760 = vld [vmem:[%s3 + $0x198] sm:$0xf]
    %v761 = vld [vmem:[%s3 + $0x19c] sm:$0xf]
    %v762 = vld [vmem:[%s3 + $0x1a0] sm:$0xf]
    %v763 = vld [vmem:[%s3 + $0x1a4] sm:$0xf]
    %v764 = vld [vmem:[%s3 + $0x1a8] sm:$0xf]
    %v765 = vld [vmem:[%s3 + $0x1ac] sm:$0xf]
    %v766 = vld [vmem:[%s3 + $0x1b0] sm:$0xf]
    %v767 = vld [vmem:[%s3 + $0x1b4] sm:$0xf]
    %v768 = vld [vmem:[%s3 + $0x1b8] sm:$0xf]
    %v769 = vld [vmem:[%s3 + $0x1bc] sm:$0xf]
    %v770 = vld [vmem:[%s3 + $0x1c0] sm:$0xf]
    %v771 = vld [vmem:[%s3 + $0x1c4] sm:$0xf]
    %v772 = vld [vmem:[%s3 + $0x1c8] sm:$0xf]
    %v773 = vld [vmem:[%s3 + $0x1cc] sm:$0xf]
    %v774 = vld [vmem:[%s3 + $0x1d0] sm:$0xf]
    %v775 = vld [vmem:[%s3 + $0x1d4] sm:$0xf]
    %v776 = vld [vmem:[%s3 + $0x1d8] sm:$0xf]
    %v777 = vld [vmem:[%s3 + $0x1dc] sm:$0xf]
    %v778 = vld [vmem:[%s3 + $0x1e0] sm:$0xf]
    %v779 = vld [vmem:[%s3 + $0x1e4] sm:$0xf]
    %v780 = vld [vmem:[%s3 + $0x1e8] sm:$0xf]
    %v781 = vld [vmem:[%s3 + $0x1ec] sm:$0xf]
    %v782 = vld [vmem:[%s3 + $0x1f0] sm:$0xf]
    %v783 = vld [vmem:[%s3 + $0x1f4] sm:$0xf]
    %v784 = vld [vmem:[%s3 + $0x1f8] sm:$0xf]
    %v785 = vld [vmem:[%s3 + $0x1fc] sm:$0xf]
    %v786 = vld [vmem:[%s4] sm:$0x1]
    %v788 = vlaneseq
    %v789 = vshrl.u32 %v788, 7
    %v790 = vsub.s32 0, %v789
    %v791 = vrot.slane %v786, %v790
    %v921 = vunpack.c.l.b16 %v658
    %v922 = vunpack.c.l.b16 %v659
    %v923 = vunpack.c.l.b16 %v660
    %v924 = vunpack.c.l.b16 %v661
    %v925 = vunpack.c.l.b16 %v662
    %v926 = vunpack.c.l.b16 %v663
    %v927 = vunpack.c.l.b16 %v664
    %v928 = vunpack.c.l.b16 %v665
    %v929 = vunpack.c.l.b16 %v666
    %v930 = vunpack.c.l.b16 %v667
    %v931 = vunpack.c.l.b16 %v668
    %v932 = vunpack.c.l.b16 %v669
    %v933 = vunpack.c.l.b16 %v670
    %v934 = vunpack.c.l.b16 %v671
    %v935 = vunpack.c.l.b16 %v672
    %v936 = vunpack.c.l.b16 %v673
    %v937 = vunpack.c.l.b16 %v674
    %v938 = vunpack.c.l.b16 %v675
    %v939 = vunpack.c.l.b16 %v676
    %v940 = vunpack.c.l.b16 %v677
    %v941 = vunpack.c.l.b16 %v678
    %v942 = vunpack.c.l.b16 %v679
    %v943 = vunpack.c.l.b16 %v680
    %v944 = vunpack.c.l.b16 %v681
    %v945 = vunpack.c.l.b16 %v682
    %v946 = vunpack.c.l.b16 %v683
    %v947 = vunpack.c.l.b16 %v684
    %v948 = vunpack.c.l.b16 %v685
    %v949 = vunpack.c.l.b16 %v686
    %v950 = vunpack.c.l.b16 %v687
    %v951 = vunpack.c.l.b16 %v688
    %v952 = vunpack.c.l.b16 %v689
    %v953 = vunpack.c.l.b16 %v690
    %v954 = vunpack.c.l.b16 %v691
    %v955 = vunpack.c.l.b16 %v692
    %v956 = vunpack.c.l.b16 %v693
    %v957 = vunpack.c.l.b16 %v694
    %v958 = vunpack.c.l.b16 %v695
    %v959 = vunpack.c.l.b16 %v696
    %v960 = vunpack.c.l.b16 %v697
    %v961 = vunpack.c.l.b16 %v698
    %v962 = vunpack.c.l.b16 %v699
    %v963 = vunpack.c.l.b16 %v700
    %v964 = vunpack.c.l.b16 %v701
    %v965 = vunpack.c.l.b16 %v702
    %v966 = vunpack.c.l.b16 %v703
    %v967 = vunpack.c.l.b16 %v704
    %v968 = vunpack.c.l.b16 %v705
    %v969 = vunpack.c.l.b16 %v706
    %v970 = vunpack.c.l.b16 %v707
    %v971 = vunpack.c.l.b16 %v708
    %v972 = vunpack.c.l.b16 %v709
    %v973 = vunpack.c.l.b16 %v710
    %v974 = vunpack.c.l.b16 %v711
    %v975 = vunpack.c.l.b16 %v712
    %v976 = vunpack.c.l.b16 %v713
    %v977 = vunpack.c.l.b16 %v714
    %v978 = vunpack.c.l.b16 %v715
    %v979 = vunpack.c.l.b16 %v716
    %v980 = vunpack.c.l.b16 %v717
    %v981 = vunpack.c.l.b16 %v718
    %v982 = vunpack.c.l.b16 %v719
    %v983 = vunpack.c.l.b16 %v720
    %v984 = vunpack.c.l.b16 %v721
    %v985 = vunpack.c.l.b16 %v722
    %v986 = vunpack.c.l.b16 %v723
    %v987 = vunpack.c.l.b16 %v724
    %v988 = vunpack.c.l.b16 %v725
    %v989 = vunpack.c.l.b16 %v726
    %v990 = vunpack.c.l.b16 %v727
    %v991 = vunpack.c.l.b16 %v728
    %v992 = vunpack.c.l.b16 %v729
    %v993 = vunpack.c.l.b16 %v730
    %v994 = vunpack.c.l.b16 %v731
    %v995 = vunpack.c.l.b16 %v732
    %v996 = vunpack.c.l.b16 %v733
    %v997 = vunpack.c.l.b16 %v734
    %v998 = vunpack.c.l.b16 %v735
    %v999 = vunpack.c.l.b16 %v736
    %v1000 = vunpack.c.l.b16 %v737
    %v1001 = vunpack.c.l.b16 %v738
    %v1002 = vunpack.c.l.b16 %v739
    %v1003 = vunpack.c.l.b16 %v740
    %v1004 = vunpack.c.l.b16 %v741
    %v1005 = vunpack.c.l.b16 %v742
    %v1006 = vunpack.c.l.b16 %v743
    %v1007 = vunpack.c.l.b16 %v744
    %v1008 = vunpack.c.l.b16 %v745
    %v1009 = vunpack.c.l.b16 %v746
    %v1010 = vunpack.c.l.b16 %v747
    %v1011 = vunpack.c.l.b16 %v748
    %v1012 = vunpack.c.l.b16 %v749
    %v1013 = vunpack.c.l.b16 %v750
    %v1014 = vunpack.c.l.b16 %v751
    %v1015 = vunpack.c.l.b16 %v752
    %v1016 = vunpack.c.l.b16 %v753
    %v1017 = vunpack.c.l.b16 %v754
    %v1018 = vunpack.c.l.b16 %v755
    %v1019 = vunpack.c.l.b16 %v756
    %v1020 = vunpack.c.l.b16 %v757
    %v1021 = vunpack.c.l.b16 %v758
    %v1022 = vunpack.c.l.b16 %v759
    %v1023 = vunpack.c.l.b16 %v760
    %v1024 = vunpack.c.l.b16 %v761
    %v1025 = vunpack.c.l.b16 %v762
    %v1026 = vunpack.c.l.b16 %v763
    %v1027 = vunpack.c.l.b16 %v764
    %v1028 = vunpack.c.l.b16 %v765
    %v1029 = vunpack.c.l.b16 %v766
    %v1030 = vunpack.c.l.b16 %v767
    %v1031 = vunpack.c.l.b16 %v768
    %v1032 = vunpack.c.l.b16 %v769
    %v1033 = vunpack.c.l.b16 %v770
    %v1034 = vunpack.c.l.b16 %v771
    %v1035 = vunpack.c.l.b16 %v772
    %v1036 = vunpack.c.l.b16 %v773
    %v1037 = vunpack.c.l.b16 %v774
    %v1038 = vunpack.c.l.b16 %v775
    %v1039 = vunpack.c.l.b16 %v776
    %v1040 = vunpack.c.l.b16 %v777
    %v1041 = vunpack.c.l.b16 %v778
    %v1042 = vunpack.c.l.b16 %v779
    %v1043 = vunpack.c.l.b16 %v780
    %v1044 = vunpack.c.l.b16 %v781
    %v1045 = vunpack.c.l.b16 %v782
    %v1046 = vunpack.c.l.b16 %v783
    %v1047 = vunpack.c.l.b16 %v784
    %v1048 = vunpack.c.l.b16 %v785
    %v1049 = vpack.c.b16 %v922, %v921
    %v1050 = vpack.c.b16 %v924, %v923
    %v1051 = vpack.c.b16 %v926, %v925
    %v1052 = vpack.c.b16 %v928, %v927
    %v1053 = vpack.c.b16 %v930, %v929
    %v1054 = vpack.c.b16 %v932, %v931
    %v1055 = vpack.c.b16 %v934, %v933
    %v1056 = vpack.c.b16 %v936, %v935
    %v1057 = vpack.c.b16 %v938, %v937
    %v1058 = vpack.c.b16 %v940, %v939
    %v1059 = vpack.c.b16 %v942, %v941
    %v1060 = vpack.c.b16 %v944, %v943
    %v1061 = vpack.c.b16 %v946, %v945
    %v1062 = vpack.c.b16 %v948, %v947
    %v1063 = vpack.c.b16 %v950, %v949
    %v1064 = vpack.c.b16 %v952, %v951
    %v1065 = vpack.c.b16 %v954, %v953
    %v1066 = vpack.c.b16 %v956, %v955
    %v1067 = vpack.c.b16 %v958, %v957
    %v1068 = vpack.c.b16 %v960, %v959
    %v1069 = vpack.c.b16 %v962, %v961
    %v1070 = vpack.c.b16 %v964, %v963
    %v1071 = vpack.c.b16 %v966, %v965
    %v1072 = vpack.c.b16 %v968, %v967
    %v1073 = vpack.c.b16 %v970, %v969
    %v1074 = vpack.c.b16 %v972, %v971
    %v1075 = vpack.c.b16 %v974, %v973
    %v1076 = vpack.c.b16 %v976, %v975
    %v1077 = vpack.c.b16 %v978, %v977
    %v1078 = vpack.c.b16 %v980, %v979
    %v1079 = vpack.c.b16 %v982, %v981
    %v1080 = vpack.c.b16 %v984, %v983
    %v1081 = vpack.c.b16 %v986, %v985
    %v1082 = vpack.c.b16 %v988, %v987
    %v1083 = vpack.c.b16 %v990, %v989
    %v1084 = vpack.c.b16 %v992, %v991
    %v1085 = vpack.c.b16 %v994, %v993
    %v1086 = vpack.c.b16 %v996, %v995
    %v1087 = vpack.c.b16 %v998, %v997
    %v1088 = vpack.c.b16 %v1000, %v999
    %v1089 = vpack.c.b16 %v1002, %v1001
    %v1090 = vpack.c.b16 %v1004, %v1003
    %v1091 = vpack.c.b16 %v1006, %v1005
    %v1092 = vpack.c.b16 %v1008, %v1007
    %v1093 = vpack.c.b16 %v1010, %v1009
    %v1094 = vpack.c.b16 %v1012, %v1011
    %v1095 = vpack.c.b16 %v1014, %v1013
    %v1096 = vpack.c.b16 %v1016, %v1015
    %v1097 = vpack.c.b16 %v1018, %v1017
    %v1098 = vpack.c.b16 %v1020, %v1019
    %v1099 = vpack.c.b16 %v1022, %v1021
    %v1100 = vpack.c.b16 %v1024, %v1023
    %v1101 = vpack.c.b16 %v1026, %v1025
    %v1102 = vpack.c.b16 %v1028, %v1027
    %v1103 = vpack.c.b16 %v1030, %v1029
    %v1104 = vpack.c.b16 %v1032, %v1031
    %v1105 = vpack.c.b16 %v1034, %v1033
    %v1106 = vpack.c.b16 %v1036, %v1035
    %v1107 = vpack.c.b16 %v1038, %v1037
    %v1108 = vpack.c.b16 %v1040, %v1039
    %v1109 = vpack.c.b16 %v1042, %v1041
    %v1110 = vpack.c.b16 %v1044, %v1043
    %v1111 = vpack.c.b16 %v1046, %v1045
    %v1112 = vpack.c.b16 %v1048, %v1047
    %1177 = vmatprep.subr.bf16.mxu0 0
    %1178 = vmatpush1.bf16.msra.mxu0 %v1049
    %1179 = vmatprep.subr.bf16.mxu0 0
    %1180 = vmatpush1.bf16.msra.mxu0 %v1050
    %1181 = vmatprep.subr.bf16.mxu0 0
    %1182 = vmatpush1.bf16.msra.mxu0 %v1051
    %1183 = vmatprep.subr.bf16.mxu0 0
    %1184 = vmatpush1.bf16.msra.mxu0 %v1052
    %1185 = vmatprep.subr.bf16.mxu0 0
    %1186 = vmatpush1.bf16.msra.mxu0 %v1053
    %1187 = vmatprep.subr.bf16.mxu0 0
    %1188 = vmatpush1.bf16.msra.mxu0 %v1054
    %1189 = vmatprep.subr.bf16.mxu0 0
    %1190 = vmatpush1.bf16.msra.mxu0 %v1055
    %1191 = vmatprep.subr.bf16.mxu0 0
    %1192 = vmatpush1.bf16.msra.mxu0 %v1056
    %1193 = vmatprep.subr.bf16.mxu0 0
    %1194 = vmatpush1.bf16.msra.mxu0 %v1057
    %1195 = vmatprep.subr.bf16.mxu0 0
    %1196 = vmatpush1.bf16.msra.mxu0 %v1058
    %1197 = vmatprep.subr.bf16.mxu0 0
    %1198 = vmatpush1.bf16.msra.mxu0 %v1059
    %1199 = vmatprep.subr.bf16.mxu0 0
    %1200 = vmatpush1.bf16.msra.mxu0 %v1060
    %1201 = vmatprep.subr.bf16.mxu0 0
    %1202 = vmatpush1.bf16.msra.mxu0 %v1061
    %1203 = vmatprep.subr.bf16.mxu0 0
    %1204 = vmatpush1.bf16.msra.mxu0 %v1062
    %1205 = vmatprep.subr.bf16.mxu0 0
    %1206 = vmatpush1.bf16.msra.mxu0 %v1063
    %1207 = vmatprep.subr.bf16.mxu0 0
    %1208 = vmatpush1.bf16.msra.mxu0 %v1064
    %1209 = vmatprep.mubr.bf16.mxu0 %v651
    %1210 = vmatmul.mubr.bf16.gmra.mrb[0].mxu0 %v650
    %v1211 = vpop.f32.mrb[0].mxu0
    %v1212 = vadd.f32 %v791, %v1211
    %v1213 = vpop.f32.mrb[0].mxu0
    %v1214 = vpop.f32.mrb[0].mxu0
    %v1215 = vadd.f32 %v791, %v1214
    %v1216 = vpop.f32.mrb[0].mxu0
    %1217 = vdwg.mxu0
    %1218 = vmatprep.subr.bf16.mxu0 0
    %1219 = vmatpush1.bf16.msra.mxu0 %v1065
    %1220 = vmatprep.subr.bf16.mxu0 0
    %1221 = vmatpush1.bf16.msra.mxu0 %v1066
    %1222 = vmatprep.subr.bf16.mxu0 0
    %1223 = vmatpush1.bf16.msra.mxu0 %v1067
    %1224 = vmatprep.subr.bf16.mxu0 0
    %1225 = vmatpush1.bf16.msra.mxu0 %v1068
    %1226 = vmatprep.subr.bf16.mxu0 0
    %1227 = vmatpush1.bf16.msra.mxu0 %v1069
    %1228 = vmatprep.subr.bf16.mxu0 0
    %1229 = vmatpush1.bf16.msra.mxu0 %v1070
    %1230 = vmatprep.subr.bf16.mxu0 0
    %1231 = vmatpush1.bf16.msra.mxu0 %v1071
    %1232 = vmatprep.subr.bf16.mxu0 0
    %1233 = vmatpush1.bf16.msra.mxu0 %v1072
    %1234 = vmatprep.subr.bf16.mxu0 0
    %1235 = vmatpush1.bf16.msra.mxu0 %v1073
    %1236 = vmatprep.subr.bf16.mxu0 0
    %1237 = vmatpush1.bf16.msra.mxu0 %v1074
    %1238 = vmatprep.subr.bf16.mxu0 0
    %1239 = vmatpush1.bf16.msra.mxu0 %v1075
    %1240 = vmatprep.subr.bf16.mxu0 0
    %1241 = vmatpush1.bf16.msra.mxu0 %v1076
    %1242 = vmatprep.subr.bf16.mxu0 0
    %1243 = vmatpush1.bf16.msra.mxu0 %v1077
    %1244 = vmatprep.subr.bf16.mxu0 0
    %1245 = vmatpush1.bf16.msra.mxu0 %v1078
    %1246 = vmatprep.subr.bf16.mxu0 0
    %1247 = vmatpush1.bf16.msra.mxu0 %v1079
    %1248 = vmatprep.subr.bf16.mxu0 0
    %1249 = vmatpush1.bf16.msra.mxu0 %v1080
    %1250 = vmatprep.mubr.bf16.mxu0 %v653
    %1251 = vmatmul.mubr.bf16.gmra.mrb[0].mxu0 %v652
    %v1252 = vpop.f32.mrb[0].mxu0
    %v1253 = vadd.f32 %v1212, %v1252
    %v1254 = vpop.f32.mrb[0].mxu0
    %v1255 = vpop.f32.mrb[0].mxu0
    %v1256 = vadd.f32 %v1215, %v1255
    %v1257 = vpop.f32.mrb[0].mxu0
    %1258 = vdwg.mxu0
    %1259 = vmatprep.subr.bf16.mxu0 0
    %1260 = vmatpush1.bf16.msra.mxu0 %v1081
    %1261 = vmatprep.subr.bf16.mxu0 0
    %1262 = vmatpush1.bf16.msra.mxu0 %v1082
    %1263 = vmatprep.subr.bf16.mxu0 0
    %1264 = vmatpush1.bf16.msra.mxu0 %v1083
    %1265 = vmatprep.subr.bf16.mxu0 0
    %1266 = vmatpush1.bf16.msra.mxu0 %v1084
    %1267 = vmatprep.subr.bf16.mxu0 0
    %1268 = vmatpush1.bf16.msra.mxu0 %v1085
    %1269 = vmatprep.subr.bf16.mxu0 0
    %1270 = vmatpush1.bf16.msra.mxu0 %v1086
    %1271 = vmatprep.subr.bf16.mxu0 0
    %1272 = vmatpush1.bf16.msra.mxu0 %v1087
    %1273 = vmatprep.subr.bf16.mxu0 0
    %1274 = vmatpush1.bf16.msra.mxu0 %v1088
    %1275 = vmatprep.subr.bf16.mxu0 0
    %1276 = vmatpush1.bf16.msra.mxu0 %v1089
    %1277 = vmatprep.subr.bf16.mxu0 0
    %1278 = vmatpush1.bf16.msra.mxu0 %v1090
    %1279 = vmatprep.subr.bf16.mxu0 0
    %1280 = vmatpush1.bf16.msra.mxu0 %v1091
    %1281 = vmatprep.subr.bf16.mxu0 0
    %1282 = vmatpush1.bf16.msra.mxu0 %v1092
    %1283 = vmatprep.subr.bf16.mxu0 0
    %1284 = vmatpush1.bf16.msra.mxu0 %v1093
    %1285 = vmatprep.subr.bf16.mxu0 0
    %1286 = vmatpush1.bf16.msra.mxu0 %v1094
    %1287 = vmatprep.subr.bf16.mxu0 0
    %1288 = vmatpush1.bf16.msra.mxu0 %v1095
    %1289 = vmatprep.subr.bf16.mxu0 0
    %1290 = vmatpush1.bf16.msra.mxu0 %v1096
    %1291 = vmatprep.mubr.bf16.mxu0 %v655
    %1292 = vmatmul.mubr.bf16.gmra.mrb[0].mxu0 %v654
    %v1293 = vpop.f32.mrb[0].mxu0
    %v1294 = vadd.f32 %v1253, %v1293
    %v1295 = vpop.f32.mrb[0].mxu0
    %v1296 = vpop.f32.mrb[0].mxu0
    %v1297 = vadd.f32 %v1256, %v1296
    %v1298 = vpop.f32.mrb[0].mxu0
    %1299 = vdwg.mxu0
    %1300 = vmatprep.subr.bf16.mxu0 0
    %1301 = vmatpush1.bf16.msra.mxu0 %v1097
    %1302 = vmatprep.subr.bf16.mxu0 0
    %1303 = vmatpush1.bf16.msra.mxu0 %v1098
    %1304 = vmatprep.subr.bf16.mxu0 0
    %1305 = vmatpush1.bf16.msra.mxu0 %v1099
    %1306 = vmatprep.subr.bf16.mxu0 0
    %1307 = vmatpush1.bf16.msra.mxu0 %v1100
    %1308 = vmatprep.subr.bf16.mxu0 0
    %1309 = vmatpush1.bf16.msra.mxu0 %v1101
    %1310 = vmatprep.subr.bf16.mxu0 0
    %1311 = vmatpush1.bf16.msra.mxu0 %v1102
    %1312 = vmatprep.subr.bf16.mxu0 0
    %1313 = vmatpush1.bf16.msra.mxu0 %v1103
    %1314 = vmatprep.subr.bf16.mxu0 0
    %1315 = vmatpush1.bf16.msra.mxu0 %v1104
    %1316 = vmatprep.subr.bf16.mxu0 0
    %1317 = vmatpush1.bf16.msra.mxu0 %v1105
    %1318 = vmatprep.subr.bf16.mxu0 0
    %1319 = vmatpush1.bf16.msra.mxu0 %v1106
    %1320 = vmatprep.subr.bf16.mxu0 0
    %1321 = vmatpush1.bf16.msra.mxu0 %v1107
    %1322 = vmatprep.subr.bf16.mxu0 0
    %1323 = vmatpush1.bf16.msra.mxu0 %v1108
    %1324 = vmatprep.subr.bf16.mxu0 0
    %1325 = vmatpush1.bf16.msra.mxu0 %v1109
    %1326 = vmatprep.subr.bf16.mxu0 0
    %1327 = vmatpush1.bf16.msra.mxu0 %v1110
    %1328 = vmatprep.subr.bf16.mxu0 0
    %1329 = vmatpush1.bf16.msra.mxu0 %v1111
    %1330 = vmatprep.subr.bf16.mxu0 0
    %1331 = vmatpush1.bf16.msra.mxu0 %v1112
    %1332 = vmatprep.mubr.bf16.mxu0 %v657
    %1333 = vmatmul.mubr.bf16.gmra.mrb[0].mxu0 %v656
    %v1334 = vpop.f32.mrb[0].mxu0
    %v1335 = vadd.f32 %v1294, %v1334
    %v1336 = vpop.f32.mrb[0].mxu0
    %v1337 = vpop.f32.mrb[0].mxu0
    %v1338 = vadd.f32 %v1297, %v1337
    %v1339 = vpop.f32.mrb[0].mxu0
    %1340 = vdwg.mxu0
    %v1341 = vmax.f32 %v1335, 0.0
    %v1342 = vmax.f32 %v1338, 0.0
    %v1343 = vpack.c.bf16 %v1342, %v1341
    %v1344 = vld [vmem:[%s5] sm:$0xf]
    %v1345 = vld [vmem:[%s5 + $0x4] sm:$0xf]
    %v1346 = vld [vmem:[%s5 + $0x8] sm:$0xf]
    %v1347 = vld [vmem:[%s5 + $0xc] sm:$0xf]
    %v1348 = vld [vmem:[%s5 + $0x10] sm:$0xf]
    %v1349 = vld [vmem:[%s5 + $0x14] sm:$0xf]
    %v1350 = vld [vmem:[%s5 + $0x18] sm:$0xf]
    %v1351 = vld [vmem:[%s5 + $0x1c] sm:$0xf]
    %v1352 = vld [vmem:[%s5 + $0x20] sm:$0xf]
    %v1353 = vld [vmem:[%s5 + $0x24] sm:$0xf]
    %v1354 = vld [vmem:[%s5 + $0x28] sm:$0xf]
    %v1355 = vld [vmem:[%s5 + $0x2c] sm:$0xf]
    %v1356 = vld [vmem:[%s5 + $0x30] sm:$0xf]
    %v1357 = vld [vmem:[%s5 + $0x34] sm:$0xf]
    %v1358 = vld [vmem:[%s5 + $0x38] sm:$0xf]
    %v1359 = vld [vmem:[%s5 + $0x3c] sm:$0xf]
    %v1360 = vld [vmem:[%s6] sm:$0x1]
    %v1362 = vlaneseq
    %v1363 = vshrl.u32 %v1362, 7
    %v1364 = vsub.s32 0, %v1363
    %v1365 = vrot.slane %v1360, %v1364
    %v1383 = vunpack.c.l.b16 %v1344
    %v1384 = vunpack.c.l.b16 %v1345
    %v1385 = vunpack.c.l.b16 %v1346
    %v1386 = vunpack.c.l.b16 %v1347
    %v1387 = vunpack.c.l.b16 %v1348
    %v1388 = vunpack.c.l.b16 %v1349
    %v1389 = vunpack.c.l.b16 %v1350
    %v1390 = vunpack.c.l.b16 %v1351
    %v1391 = vunpack.c.l.b16 %v1352
    %v1392 = vunpack.c.l.b16 %v1353
    %v1393 = vunpack.c.l.b16 %v1354
    %v1394 = vunpack.c.l.b16 %v1355
    %v1395 = vunpack.c.l.b16 %v1356
    %v1396 = vunpack.c.l.b16 %v1357
    %v1397 = vunpack.c.l.b16 %v1358
    %v1398 = vunpack.c.l.b16 %v1359
    %v1399 = vpack.c.b16 %v1384, %v1383
    %v1400 = vpack.c.b16 %v1386, %v1385
    %v1401 = vpack.c.b16 %v1388, %v1387
    %v1402 = vpack.c.b16 %v1390, %v1389
    %v1403 = vpack.c.b16 %v1392, %v1391
    %v1404 = vpack.c.b16 %v1394, %v1393
    %v1405 = vpack.c.b16 %v1396, %v1395
    %v1406 = vpack.c.b16 %v1398, %v1397
    %1415 = vmatprep.subr.bf16.mxu0 0
    %1416 = vmatpush1.bf16.msra.mxu0 %v1399
    %1417 = vmatprep.subr.bf16.mxu0 0
    %1418 = vmatpush1.bf16.msra.mxu0 %v1400
    %1419 = vmatprep.subr.bf16.mxu0 0
    %1420 = vmatpush1.bf16.msra.mxu0 %v1401
    %1421 = vmatprep.subr.bf16.mxu0 0
    %1422 = vmatpush1.bf16.msra.mxu0 %v1402
    %1423 = vmatprep.subr.bf16.mxu0 0
    %1424 = vmatpush1.bf16.msra.mxu0 %v1403
    %1425 = vmatprep.subr.bf16.mxu0 0
    %1426 = vmatpush1.bf16.msra.mxu0 %v1404
    %1427 = vmatprep.subr.bf16.mxu0 0
    %1428 = vmatpush1.bf16.msra.mxu0 %v1405
    %1429 = vmatprep.subr.bf16.mxu0 0
    %1430 = vmatpush1.bf16.msra.mxu0 %v1406
    %1431 = vmatprep.subr.bf16.mxu0 0
    %1432 = vmatpush1.bf16.msra.mxu0 0
    %1433 = vmatprep.subr.bf16.mxu0 0
    %1434 = vmatpush1.bf16.msra.mxu0 0
    %1435 = vmatprep.subr.bf16.mxu0 0
    %1436 = vmatpush1.bf16.msra.mxu0 0
    %1437 = vmatprep.subr.bf16.mxu0 0
    %1438 = vmatpush1.bf16.msra.mxu0 0
    %1439 = vmatprep.subr.bf16.mxu0 0
    %1440 = vmatpush1.bf16.msra.mxu0 0
    %1441 = vmatprep.subr.bf16.mxu0 0
    %1442 = vmatpush1.bf16.msra.mxu0 0
    %1443 = vmatprep.subr.bf16.mxu0 0
    %1444 = vmatpush1.bf16.msra.mxu0 0
    %1445 = vmatprep.subr.bf16.mxu0 0
    %1446 = vmatpush1.bf16.msra.mxu0 0
    %1447 = vmatprep.mubr.bf16.mxu0 0
    %1448 = vmatmul.mubr.bf16.gmra.mrb[0].mxu0 %v1343
    %v1449 = vpop.f32.mrb[0].mxu0
    %v1450 = vadd.f32 %v1365, %v1449
    %v1451 = vpop.f32.mrb[0].mxu0
    %v1452 = vpop.f32.mrb[0].mxu0
    %v1453 = vadd.f32 %v1365, %v1452
    %v1454 = vpop.f32.mrb[0].mxu0
    %1455 = vdwg.mxu0
    %v1456 = vxor.u32 %v1450, 2147483648
    %v1457 = vxor.u32 %v1453, 2147483648
    %v1458 = vmul.f32 %v1456, 1.442695
    %v1459 = vpow.pop %v1458
    %v1460 = vmul.f32 %v1457, 1.442695
    %v1461 = vpow.pop %v1460
    %v1462 = vadd.f32 %v1459, 1.0
    %v1463 = vadd.f32 %v1461, 1.0
    %v1464 = vrcp.pop %v1462
    %v1465 = vmul.f32 1.0, %v1464
    %v1466 = vrcp.pop %v1463
    %v1467 = vmul.f32 1.0, %v1466
    %1468 = vst [vmem:[#allocation2] sm:$0xff] %v1465
    %1469 = vst [vmem:[#allocation2 + $0x8] sm:$0xff] %v1467
    // Predicated region
    $region30: #{mlp_forward.1} parent=1 // pred_check
      _
    $region31: #{mlp_forward.1} parent=1 // pred_check_branch
      %1471 = sbr.rel (0) target = $region33
    $region32: #{mlp_forward.1} parent=1 // pred_region
      %s1473 = ssub.s32 256, 256
      %1474 = vsyncadd [#allocation3], %s1473
      %s1475 = sshll.u32 [#allocation2], 4
      %s1476 = int_to_ptr.vmem [resolvable:$true] %s1475
      %1481 = dma.vmem_to_hbm [thread:$0]  %s1476, 256, %s7, [#allocation3], 128, 128, 8
    $region33: #{mlp_forward.1} parent=1 // pred_fallthru
      _
    // Predicated region
    $region34: #{mlp_forward.1} parent=1 // pred_check
      _
    $region35: #{mlp_forward.1} parent=1 // pred_check_branch
      %1483 = sbr.rel (0) target = $region37
    $region36: #{mlp_forward.1} parent=1 // pred_region
      %1484 = dma.done [#allocation3], 256
    $region37: #{mlp_forward.1} parent=1 // pred_fallthru
      _
    %1485 = vsyncpa [#allocation3], 1

</llo_original>
